<compile_context>
chip_gen: v7x
topology: tpu7x:2x2x1
jax: 0.10.0
libtpu: 0.0.40
codegen_flags: <defaults>
</compile_context>

<pallas_src>
import jax
import jax.numpy as jnp
from jax.experimental import pallas as pl
from jax.experimental.pallas import tpu as pltpu


# ---------------------------------------------------------------------------
# Kernels
# ---------------------------------------------------------------------------

def _pool_kernel(x_ref, acc_ref):
    """Accumulate per-(b, c) spatial sums over lane-axis tiles.

    x_ref:   (1, C, TS)  one spatial tile of one batch element
    acc_ref: (1, C, 1)   f32 running sum; output block is revisited across the
                         spatial-tile grid axis (accumulator pattern).
    """
    t = pl.program_id(1)

    @pl.when(t == 0)
    def _():
        acc_ref[...] = jnp.zeros_like(acc_ref)

    # f32 accumulation even if x is bf16 (avoids pooling error over large S).
    acc_ref[...] += jnp.sum(x_ref[...].astype(jnp.float32), axis=-1, keepdims=True)


def _scale_kernel(x_ref, delta_ref, o_ref):
    """out = x + x * delta, with delta = sigmoid(fc(pool(x))) - 0.5.

    x_ref:     (1, C, TS)
    delta_ref: (1, C, 1)  f32 gate offset, broadcast over the lane (spatial) axis
    o_ref:     (1, C, TS) lane-dense output tile
    """
    x = x_ref[...].astype(jnp.float32)
    o_ref[...] = (x + x * delta_ref[...]).astype(o_ref.dtype)


# ---------------------------------------------------------------------------
# Wrapper
# ---------------------------------------------------------------------------

def _pick_spatial_tile(S, C, itemsize, target_block_bytes=1 << 20):
    """Largest multiple of 128 dividing S whose (C, TS) block stays under budget."""
    if S % 128 != 0:
        # TODO(synk): pad ragged spatial sizes to a multiple of 128 instead of
        # falling back to a single full-extent tile.
        return S
    max_ts = max(128, target_block_bytes // (C * itemsize))
    ts = 128
    for cand in range(128, S + 1, 128):
        if S % cand == 0 and cand <= max_ts:
            ts = cand
    return ts


def se_layer_c(x, w1, w2, *, spatial_tile=None):
    """SELayerC forward.

    x:  (B, C, T, H, W)
    w1: (C, Cr)  == torch W1.T  (Linear(C, Cr, bias=False))
    w2: (Cr, C)  == torch W2.T  (Linear(Cr, C, bias=False))
    """
    B, C, T, H, W = x.shape
    S = T * H * W
    # Contiguous view: trailing-dim reshape only -- no transpose, no extra HBM pass.
    x3 = x.reshape(B, C, S)

    ts = spatial_tile if spatial_tile is not None else _pick_spatial_tile(
        S, C, x.dtype.itemsize)
    assert S % ts == 0 and (ts % 128 == 0 or ts == S), (S, ts)
    n_t = S // ts

    # -- Pass 1: spatial sums (squeeze) --------------------------------------
    pooled_sum = pl.pallas_call(
        _pool_kernel,
        out_shape=jax.ShapeDtypeStruct((B, C, 1), jnp.float32),
        grid_spec=pltpu.PrefetchScalarGridSpec(
            num_scalar_prefetch=0,
            grid=(B, n_t),
            in_specs=[pl.BlockSpec((1, C, ts), lambda b, t: (b, 0, t))],
            out_specs=pl.BlockSpec((1, C, 1), lambda b, t: (b, 0, 0)),
        ),
        compiler_params=pltpu.CompilerParams(
            dimension_semantics=("parallel", "arbitrary")),
    )(x3)

    # -- Excitation (tiny, batched across B; done once in XLA) ---------------
    pooled = pooled_sum[:, :, 0] * (1.0 / S)                    # (B, C) f32
    h = jnp.maximum(pooled @ w1.astype(jnp.float32), 0.0)       # (B, Cr)
    y = jax.nn.sigmoid(h @ w2.astype(jnp.float32))              # (B, C)
    delta = (y - 0.5).reshape(B, C, 1)                          # gate offset, f32

    # -- Pass 2: scale (lane-dense tiled elementwise) ------------------------
    out = pl.pallas_call(
        _scale_kernel,
        out_shape=jax.ShapeDtypeStruct((B, C, S), x.dtype),
        grid_spec=pltpu.PrefetchScalarGridSpec(
            num_scalar_prefetch=0,
            grid=(B, n_t),
            in_specs=[pl.BlockSpec((1, C, ts), lambda b, t: (b, 0, t)),
                      pl.BlockSpec((1, C, 1), lambda b, t: (b, 0, 0))],
            out_specs=pl.BlockSpec((1, C, ts), lambda b, t: (b, 0, t)),
        ),
        compiler_params=pltpu.CompilerParams(
            dimension_semantics=("parallel", "parallel")),
    )(x3, delta)

    return out.reshape(B, C, T, H, W)


def se_layer_c_ref(x, w1, w2):
    """Pure-JAX reference of the SELayerC forward."""
    pooled = jnp.mean(x, axis=(2, 3, 4))                        # (B, C)
    y = jax.nn.sigmoid(jnp.maximum(pooled @ w1, 0.0) @ w2)      # (B, C)
    delta = (y - 0.5)[:, :, None, None, None]
    return x + x * delta


# ---------------------------------------------------------------------------
# Demo / self-test
# ---------------------------------------------------------------------------

if __name__ == "__main__":
    B, C, T, H, W = 2, 64, 4, 16, 16       # S = T*H*W = 1024
    reduction = 16
    Cr = C // reduction

    key = jax.random.PRNGKey(0)
    kx, k1, k2 = jax.random.split(key, 3)

    x = jax.random.normal(kx, (B, C, T, H, W), dtype=jnp.float32)
    # Synthetic weights stored transposed for `pooled @ W.T` convention:
    # torch W1: (Cr, C) -> w1 = W1.T: (C, Cr);  torch W2: (C, Cr) -> w2 = W2.T: (Cr, C)
    w1 = jax.random.normal(k1, (C, Cr), dtype=jnp.float32) * (1.0 / C ** 0.5)
    w2 = jax.random.normal(k2, (Cr, C), dtype=jnp.float32) * (1.0 / Cr ** 0.5)

    # spatial_tile=256 -> 4 lane-dense spatial tiles per batch element, which
    # exercises the multi-tile accumulator and the (B, n_tiles) pipeline.
    out = se_layer_c(x, w1, w2, spatial_tile=256)
    jax.block_until_ready(out)

    ref = se_layer_c_ref(x, w1, w2)
    assert out.shape == x.shape
    assert jnp.allclose(out, ref, atol=1e-5, rtol=1e-5), float(
        jnp.max(jnp.abs(out - ref)))

    print("KERNEL_OK")
</pallas_src>

<mosaic_0001>
module attributes {stable_mosaic.version = 11 : i64} {
  func.func @_pool_kernel(%arg0: i32, %arg1: i32, %arg2: memref<1x64x256xf32, #tpu.memory_space<vmem>>, %arg3: memref<1x64x1xf32, #tpu.memory_space<vmem>>) attributes {dimension_semantics = [#tpu.dimension_semantics<parallel>, #tpu.dimension_semantics<arbitrary>], iteration_bounds = array<i64: 2, 4>, scalar_prefetch = 0 : i64, scratch_operands = 0 : i64, tpu.core_type = #tpu.core_type<tc>, window_params = [{transform_indices = @transform_0, window_bounds = array<i64: 1, 64, 256>}, {transform_indices = @transform_1, window_bounds = array<i64: 1, 64, 1>}]} {
    %c0_i32 = arith.constant 0 : i32
    %0 = arith.cmpi eq, %arg1, %c0_i32 : i32
    %1 = arith.extui %0 : i1 to i32
    %c0_i32_0 = arith.constant 0 : i32
    %2 = arith.cmpi ne, %1, %c0_i32_0 : i32
    scf.if %2 {
      %cst_9 = arith.constant 0.000000e+00 : f32
      %9 = vector.broadcast %cst_9 : f32 to vector<1x64x1xf32>
      %c0_10 = arith.constant 0 : index
      %c0_11 = arith.constant 0 : index
      %c0_12 = arith.constant 0 : index
      %10 = vector.load %arg3[%c0_10, %c0_11, %c0_12] : memref<1x64x1xf32, #tpu.memory_space<vmem>>, vector<1x64x1xf32>
      tpu.vector_store %arg3[%c0_10, %c0_11, %c0_12], %9 {strides = array<i32>} : memref<1x64x1xf32, #tpu.memory_space<vmem>>, vector<1x64x1xf32>,
    } else {
    }
    %c0 = arith.constant 0 : index
    %c0_1 = arith.constant 0 : index
    %c0_2 = arith.constant 0 : index
    %3 = vector.load %arg3[%c0, %c0_1, %c0_2] : memref<1x64x1xf32, #tpu.memory_space<vmem>>, vector<1x64x1xf32>
    %c0_3 = arith.constant 0 : index
    %c0_4 = arith.constant 0 : index
    %c0_5 = arith.constant 0 : index
    %4 = vector.load %arg2[%c0_3, %c0_4, %c0_5] : memref<1x64x256xf32, #tpu.memory_space<vmem>>, vector<1x64x256xf32>
    %cst = arith.constant dense<0.000000e+00> : vector<1x64xf32>
    %5 = vector.multi_reduction <add>, %4, %cst [2] : vector<1x64x256xf32> to vector<1x64xf32>
    %6 = vector.shape_cast %5 : vector<1x64xf32> to vector<1x64x1xf32>
    %7 = arith.addf %3, %6 : vector<1x64x1xf32>
    %c0_6 = arith.constant 0 : index
    %c0_7 = arith.constant 0 : index
    %c0_8 = arith.constant 0 : index
    %8 = vector.load %arg3[%c0_6, %c0_7, %c0_8] : memref<1x64x1xf32, #tpu.memory_space<vmem>>, vector<1x64x1xf32>
    tpu.vector_store %arg3[%c0_6, %c0_7, %c0_8], %7 {strides = array<i32>} : memref<1x64x1xf32, #tpu.memory_space<vmem>>, vector<1x64x1xf32>,
    return
  }
  func.func @transform_0(%arg0: i32, %arg1: i32) -> (i32, i32, i32) {
    %c0_i32 = arith.constant 0 : i32
    %c0_i32_0 = arith.constant 0 : i32
    return %arg0, %c0_i32, %arg1 : i32, i32, i32
  }
  func.func @transform_1(%arg0: i32, %arg1: i32) -> (i32, i32, i32) {
    %c0_i32 = arith.constant 0 : i32
    %c0_i32_0 = arith.constant 0 : i32
    %c0_i32_1 = arith.constant 0 : i32
    return %arg0, %c0_i32, %c0_i32_0 : i32, i32, i32
  }
}

</mosaic_0001>

<llo_original>
// kernel: tpu_custom_call.1
$region0: #{tpu_custom_call.1}
  #allocation0 [shape = 'u32[]', space=smem, size = 0x4, offset = 0x4, fixed_abs, tag = 'smem constant byte address 0x4 - core index']
  #allocation1 [shape = 'u32[144,128]{1,0:T(1,128)}', space=vmem, size = 0x12000, scoped, tag = 'internal scratch']
  %s0 = inlined_call_operand.hbm [shape: f32[2,64,1024], index: 0, kind: input, shape index: {}]
  %s1 = inlined_call_operand.vmem [shape: f32[2,64,1], index: 1, kind: output, shape index: {}]
  %s2 = sld [smem:[#allocation0]]
  $region45: #{tpu_custom_call.1} parent=0
    _
  %s4 = ssub.s32 1, %s2
  %s5 = scalar_select 0, %s4, %s2
  $region1: #{tpu_custom_call.1} parent=0
    #allocation2 [shape = 'u8[131072]{0}', space=vmem, size = 0x20000, scoped, tag = 'input window, operand 0']
    #allocation3 [shape = 's32[2]{0}', space=sflag, size = 0x8, scoped, tag = 'scoped memory for tpu_custom_call.1']
    %6 = vsyncpa [#allocation3], 0
    %s7 = scalar_lea.sflag [#allocation3], 1
    %8 = vsyncpa %s7, 0
    loop: start=0, step=1, limit=10
    $region2: #{tpu_custom_call.1} parent=1 // loop_pre_header
      _
    $region3: #{tpu_custom_call.1} parent=1 // loop_header
      %s10 = sphi 0, %s14
      %p11 = scmp.ge.s32.totalorder %s10, 10
      %s17 = sphi 0, %s29
      %s18 = sphi 0, %s25
      %s19 = sphi 0, %s17
      %s20 = sphi 0, %s18
      %s21 = sphi 0, %s19
      %s22 = sphi 0, %s20
      %s34 = sphi 0, %s36
      %s37 = sphi 0, %s34
      %s38 = sphi 0, %s37
      %s54 = sphi 0, %s38
      %s60 = sphi 0, %s62
      %s63 = sphi 0, %s60
      %s64 = sphi 0, %s63
      %s80 = sphi 0, %s64
    $region4: #{tpu_custom_call.1} parent=1 // loop_header_branch
      %13 = sbr.rel (%p11) target = $region8
    $region5: #{tpu_custom_call.1} parent=1 // loop_body
      %s15 = ssub.s32 %s10, 1
      %s16 = ssub.s32 %s10, 2
      %s23 = sadd.s32 1, %s18
      %p24 = scmp.ge.s32.totalorder %s23, 4
      %s25 = scalar_select %p24, 0, %s23
      %s26 = sadd.s32 1, %s17
      %s27 = scalar_select %p24, %s26, %s17
      %p28 = scmp.ge.s32.totalorder %s27, 2
      %s29 = scalar_select %p28, 0, %s27
      %s30 = ssub.s32 %s17, %s29
      %s31 = ssub.s32 %s18, %s25
      %s32 = sor.u32 %s30, %s31
      %p33 = scmp.eq.s32.totalorder %s32, 0
      %s35 = sadd.s32 %s34, 1
      %s36 = scalar_select %p33, %s34, %s35
      %p39 = pneg %p33
      %p40 = scmp.eq.s32.totalorder %s10, 7
      %p41 = por %p39, %p40
      %p42 = scmp.ne.s32.totalorder %s34, %s37
      %p43 = scmp.eq.s32.totalorder %s10, 0
      %p44 = por %p42, %p43
      %p45 = scmp.ne.s32.totalorder %s34, %s37
      %p46 = scmp.eq.s32.totalorder %s15, 7
      %p47 = por %p45, %p46
      %p48 = scmp.ne.s32.totalorder %s37, %s38
      %p49 = scmp.eq.s32.totalorder %s15, 0
      %p50 = por %p48, %p49
      %p51 = scmp.ne.s32.totalorder %s37, %s38
      %p52 = scmp.eq.s32.totalorder %s16, 7
      %p53 = por %p51, %p52
      %p55 = scmp.ne.s32.totalorder %s38, %s54
      %p56 = scmp.eq.s32.totalorder %s16, 0
      %p57 = por %p55, %p56
      %s58 = ssub.s32 %s17, %s29
      %p59 = scmp.eq.s32.totalorder %s58, 0
      %s61 = sadd.s32 %s60, 1
      %s62 = scalar_select %p59, %s60, %s61
      %p65 = pneg %p59
      %p66 = scmp.eq.s32.totalorder %s10, 7
      %p67 = por %p65, %p66
      %p68 = scmp.ne.s32.totalorder %s60, %s63
      %p69 = scmp.eq.s32.totalorder %s10, 0
      %p70 = por %p68, %p69
      %p71 = scmp.ne.s32.totalorder %s60, %s63
      %p72 = scmp.eq.s32.totalorder %s15, 7
      %p73 = por %p71, %p72
      %p74 = scmp.ne.s32.totalorder %s63, %s64
      %p75 = scmp.eq.s32.totalorder %s15, 0
      %p76 = por %p74, %p75
      %p77 = scmp.ne.s32.totalorder %s63, %s64
      %p78 = scmp.eq.s32.totalorder %s16, 7
      %p79 = por %p77, %p78
      %p81 = scmp.ne.s32.totalorder %s64, %s80
      %p82 = scmp.eq.s32.totalorder %s16, 0
      %p83 = por %p81, %p82
      %p84 = scmp.le.s32.totalorder 1, %s10
      %p85 = scmp.lt.s32.totalorder %s10, 9
      %p86 = pnand %p84, %p85
      %p87 = pneg %p86
      // Predicated region
      $region9: #{tpu_custom_call.1} parent=5 // pred_check
        _
      $region10: #{tpu_custom_call.1} parent=5 // pred_check_branch
        %89 = sbr.rel (%p86) target = $region12
      $region11: #{tpu_custom_call.1} parent=5 // pred_region
        %s90 = ssub.s32 %s10, 1
      $region12: #{tpu_custom_call.1} parent=5 // pred_fallthru
        _
      %p91 = scmp.lt.s32.totalorder %s10, 8
      // Predicated region
      $region13: #{tpu_custom_call.1} parent=5 // pred_check
        %p92 = pneg %p91
      $region14: #{tpu_custom_call.1} parent=5 // pred_check_branch
        %94 = sbr.rel (%p92) target = $region16
      $region15: #{tpu_custom_call.1} parent=5 // pred_region
        // Predicated region
        $region17: #{tpu_custom_call.1} parent=15 // pred_check
          %p95 = pneg %p44
        $region18: #{tpu_custom_call.1} parent=15 // pred_check_branch
          %97 = sbr.rel (%p95) target = $region20
        $region19: #{tpu_custom_call.1} parent=15 // pred_region
          %s98 = sand.u32 %s34, 1
          %s99 = scalar_lea.sflag [#allocation3], %s98
          %s100 = sand.u32 %s34, 1
          %s101 = smul.addr %s100, 128
          %s102 = scalar_lea.vmem [#allocation2], %s101
          %s103 = smul.u32 2, %s18
          %s105 = ssub.s32 2048, 2048
          %106 = vsyncadd %s99, %s105
          %s107 = smul.addr %s17, 64
          %s108 = sadd.s32 %s103, %s107
          %s109 = smul.addr %s108, 128
          %s110 = scalar_lea.hbm %s0, %s109
          %s111 = sshll.u32 %s102, 4
          %s112 = int_to_ptr.vmem [resolvable:$true] %s111
          %117 = dma.hbm_to_vmem [thread:$0]  %s110, 2048, %s112, %s99, 1024, 256, 16
        $region20: #{tpu_custom_call.1} parent=15 // pred_fallthru
          _
      $region16: #{tpu_custom_call.1} parent=5 // pred_fallthru
        _
      %p118 = scmp.le.s32.totalorder 1, %s10
      %p119 = scmp.lt.s32.totalorder %s10, 9
      %p120 = pnand %p118, %p119
      %p121 = pneg %p120
      // Predicated region
      $region21: #{tpu_custom_call.1} parent=5 // pred_check
        _
      $region22: #{tpu_custom_call.1} parent=5 // pred_check_branch
        %123 = sbr.rel (%p120) target = $region24
      $region23: #{tpu_custom_call.1} parent=5 // pred_region
        %s124 = ssub.s32 %s10, 1
        %s125 = sand.u32 %s37, 1
        %s126 = scalar_lea.sflag [#allocation3], %s125
        %s127 = sand.u32 %s37, 1
        %s128 = smul.addr %s127, 128
        %s129 = scalar_lea.vmem [#allocation2], %s128
        // Predicated region
        $region25: #{tpu_custom_call.1} parent=23 // pred_check
          %p130 = pneg %p50
        $region26: #{tpu_custom_call.1} parent=23 // pred_check_branch
          %132 = sbr.rel (%p130) target = $region28
        $region27: #{tpu_custom_call.1} parent=23 // pred_region
          %133 = dma.done %s126, 2048
        $region28: #{tpu_custom_call.1} parent=23 // pred_fallthru
          _
        %s134 = sand.u32 %s37, 1
        %s135 = scalar_lea.sflag [#allocation3], %s134
        %s136 = sand.u32 %s37, 1
        %s137 = smul.addr %s136, 128
        %s138 = scalar_lea.vmem [#allocation2], %s137
        %p139 = pneg %p50
        %p140 = pneg %p47
        %p141 = pneg %p76
        %p142 = pneg %p73
        %p143 = scmp.lt.s32.totalorder %s19, 1
        %s144 = scalar_select %p143, %s19, 1
        %s145 = smul.addr %s144, 8
        %s146 = smul.addr %s145, 8
        %s147 = scalar_lea.vmem %s1, %s146
        %s148 = smul.u32 2, %s20
        %p149 = scmp.lt.s32.totalorder %s19, 1
        %s150 = scalar_select %p149, %s19, 1
        %s151 = smul.addr %s150, 8
        %s152 = smul.addr %s151, 8
        %s153 = scalar_lea.vmem %s1, %s152
        %p154 = scmp.eq.s32.totalorder %s20, 0
        // Predicated region
        $region29: #{tpu_custom_call.1} parent=23 // pred_check
          %p155 = pneg %p154
        $region30: #{tpu_custom_call.1} parent=23 // pred_check_branch
          %157 = sbr.rel (%p155) target = $region32
        $region31: #{tpu_custom_call.1} parent=23 // pred_region
          %vm158 = vcmask 7168
          %159 = vst.msk [vmem:[%s153] sm:$0xff] %vm158, 0.0
          %160 = vst.msk [vmem:[%s153 + $0x8] sm:$0xff] %vm158, 0.0
          %161 = vst.msk [vmem:[%s153 + $0x10] sm:$0xff] %vm158, 0.0
          %162 = vst.msk [vmem:[%s153 + $0x18] sm:$0xff] %vm158, 0.0
          %163 = vst.msk [vmem:[%s153 + $0x20] sm:$0xff] %vm158, 0.0
          %164 = vst.msk [vmem:[%s153 + $0x28] sm:$0xff] %vm158, 0.0
          %165 = vst.msk [vmem:[%s153 + $0x30] sm:$0xff] %vm158, 0.0
          %166 = vst.msk [vmem:[%s153 + $0x38] sm:$0xff] %vm158, 0.0
        $region32: #{tpu_custom_call.1} parent=23 // pred_fallthru
          _
        %v167 = vld [vmem:[%s153] sm:$0xff]
        %v168 = vld [vmem:[%s153 + $0x8] sm:$0xff]
        %v169 = vld [vmem:[%s153 + $0x10] sm:$0xff]
        %v170 = vld [vmem:[%s153 + $0x18] sm:$0xff]
        %v171 = vld [vmem:[%s153 + $0x20] sm:$0xff]
        %v172 = vld [vmem:[%s153 + $0x28] sm:$0xff]
        %v173 = vld [vmem:[%s153 + $0x30] sm:$0xff]
        %v174 = vld [vmem:[%s153 + $0x38] sm:$0xff]
        %v175 = vld [vmem:[%s129] sm:$0xff]
        %v176 = vld [vmem:[%s129 + $0x8] sm:$0xff]
        %v177 = vld [vmem:[%s129 + $0x10] sm:$0xff]
        %v178 = vld [vmem:[%s129 + $0x18] sm:$0xff]
        %v179 = vld [vmem:[%s129 + $0x20] sm:$0xff]
        %v180 = vld [vmem:[%s129 + $0x28] sm:$0xff]
        %v181 = vld [vmem:[%s129 + $0x30] sm:$0xff]
        %v182 = vld [vmem:[%s129 + $0x38] sm:$0xff]
        %v183 = vld [vmem:[%s129 + $0x40] sm:$0xff]
        %v184 = vld [vmem:[%s129 + $0x48] sm:$0xff]
        %v185 = vld [vmem:[%s129 + $0x50] sm:$0xff]
        %v186 = vld [vmem:[%s129 + $0x58] sm:$0xff]
        %v187 = vld [vmem:[%s129 + $0x60] sm:$0xff]
        %v188 = vld [vmem:[%s129 + $0x68] sm:$0xff]
        %v189 = vld [vmem:[%s129 + $0x70] sm:$0xff]
        %v190 = vld [vmem:[%s129 + $0x78] sm:$0xff]
        %v191 = vadd.f32 %v175, %v176
        %192 = vadd.xlane.f32.xlu0 %v191
        %v193 = vpop.xlane.xlu0 %192
        %v194 = vadd.f32 %v177, %v178
        %195 = vadd.xlane.f32.xlu0 %v194
        %v196 = vpop.xlane.xlu0 %195
        %v197 = vadd.f32 %v179, %v180
        %198 = vadd.xlane.f32.xlu0 %v197
        %v199 = vpop.xlane.xlu0 %198
        %v200 = vadd.f32 %v181, %v182
        %201 = vadd.xlane.f32.xlu0 %v200
        %v202 = vpop.xlane.xlu0 %201
        %v203 = vadd.f32 %v183, %v184
        %204 = vadd.xlane.f32.xlu0 %v203
        %v205 = vpop.xlane.xlu0 %204
        %v206 = vadd.f32 %v185, %v186
        %207 = vadd.xlane.f32.xlu0 %v206
        %v208 = vpop.xlane.xlu0 %207
        %v209 = vadd.f32 %v187, %v188
        %210 = vadd.xlane.f32.xlu0 %v209
        %v211 = vpop.xlane.xlu0 %210
        %v212 = vadd.f32 %v189, %v190
        %213 = vadd.xlane.f32.xlu0 %v212
        %v214 = vpop.xlane.xlu0 %213
        %v215 = vadd.f32 %v167, %v193
        %v216 = vadd.f32 %v168, %v196
        %v217 = vadd.f32 %v169, %v199
        %v218 = vadd.f32 %v170, %v202
        %v219 = vadd.f32 %v171, %v205
        %v220 = vadd.f32 %v172, %v208
        %v221 = vadd.f32 %v173, %v211
        %v222 = vadd.f32 %v174, %v214
        %vm223 = vcmask 7168
        %224 = vst.msk [vmem:[%s153] sm:$0xff] %vm223, %v215
        %225 = vst.msk [vmem:[%s153 + $0x8] sm:$0xff] %vm223, %v216
        %226 = vst.msk [vmem:[%s153 + $0x10] sm:$0xff] %vm223, %v217
        %227 = vst.msk [vmem:[%s153 + $0x18] sm:$0xff] %vm223, %v218
        %228 = vst.msk [vmem:[%s153 + $0x20] sm:$0xff] %vm223, %v219
        %229 = vst.msk [vmem:[%s153 + $0x28] sm:$0xff] %vm223, %v220
        %230 = vst.msk [vmem:[%s153 + $0x30] sm:$0xff] %vm223, %v221
        %231 = vst.msk [vmem:[%s153 + $0x38] sm:$0xff] %vm223, %v222
        %p232 = scmp.lt.s32.totalorder %s19, 1
        %s233 = scalar_select %p232, %s19, 1
        %s234 = smul.addr %s233, 8
        %s235 = smul.addr %s234, 8
        %s236 = scalar_lea.vmem %s1, %s235
        // Predicated region
        $region33: #{tpu_custom_call.1} parent=23 // pred_check
          %p237 = pneg %p73
        $region34: #{tpu_custom_call.1} parent=23 // pred_check_branch
          %239 = sbr.rel (%p237) target = $region36
        $region35: #{tpu_custom_call.1} parent=23 // pred_region
          _
        $region36: #{tpu_custom_call.1} parent=23 // pred_fallthru
          _
      $region24: #{tpu_custom_call.1} parent=5 // pred_fallthru
        _
      %p240 = scmp.le.s32.totalorder 2, %s10
      // Predicated region
      $region37: #{tpu_custom_call.1} parent=5 // pred_check
        %p241 = pneg %p240
      $region38: #{tpu_custom_call.1} parent=5 // pred_check_branch
        %243 = sbr.rel (%p241) target = $region40
      $region39: #{tpu_custom_call.1} parent=5 // pred_region
        %s244 = ssub.s32 %s10, 2
        // Predicated region
        $region41: #{tpu_custom_call.1} parent=39 // pred_check
          %p245 = pneg %p79
        $region42: #{tpu_custom_call.1} parent=39 // pred_check_branch
          %247 = sbr.rel (%p245) target = $region44
        $region43: #{tpu_custom_call.1} parent=39 // pred_region
          %p248 = scmp.lt.s32.totalorder %s21, 1
          %s249 = scalar_select %p248, %s21, 1
          %s250 = smul.addr %s249, 8
          %s251 = smul.addr %s250, 8
          %s252 = scalar_lea.vmem %s1, %s251
        $region44: #{tpu_custom_call.1} parent=39 // pred_fallthru
          _
      $region40: #{tpu_custom_call.1} parent=5 // pred_fallthru
        _
    $region6: #{tpu_custom_call.1} parent=1 // loop_footer
      %s14 = sadd.s32 1, %s10
    $region7: #{tpu_custom_call.1} parent=1 // loop_footer_branch
      %9 = sbr.rel target = $region3
    $region8: #{tpu_custom_call.1} parent=1 // loop_exit
      _
    %253 = vsyncpa [#allocation3], 1
    %s254 = scalar_lea.sflag [#allocation3], 1
    %255 = vsyncpa %s254, 1

</llo_original>
